<compile_context>
chip_gen: v6e
topology: v6e:2x2x1
jax: 0.10.0
libtpu: 0.0.40
codegen_flags: <defaults>
</compile_context>

<pallas_src>
import functools

import jax
import jax.numpy as jnp
from jax import lax
from jax.experimental import pallas as pl
from jax.experimental.pallas import tpu as pltpu

# Packed parameter slabs:
#   weight slab (56, 32) bf16:  rows  0:32, cols 0:6  = W1 (32, 6)
#                               rows 32:48, cols 0:32 = W2 (16, 32)
#                               rows 48:50, cols 0:16 = W3 ( 2, 16)  (rows 50:56 zero)
#   bias slab   (56, 1)  f32:   rows  0:32 = b1, 32:48 = b2, 48:50 = b3 (rows 50:56 zero)
W_ROWS, W_COLS = 56, 32
B_ROWS = 56

# dot_general dims contracting both operands' minor dim ("NT" matmul, the same
# pattern as q @ k^T in flash attention): (m, k) x (n, k) -> (m, n).
_NT_DIMS = (((1,), (1,)), ((), ()))


def _cdiv(a, b):
    return -(-a // b)


def _round_up(a, m):
    return _cdiv(a, m) * m


def _default_epilogue_dtype():
    """bf16 bias+ReLU epilogue on chips with a bf16 VPU (v6e/v7x); f32 on v5e & older."""
    try:
        kind = jax.devices()[0].device_kind.lower()
    except Exception:
        return jnp.bfloat16
    for old in ("v2", "v3", "v4", "v5"):
        if old in kind:
            return jnp.float32
    return jnp.bfloat16


def _choose_tiling(batch, tb_max):
    """Pick (tile, padded_batch, n_tiles).

    tile is a multiple of 128; pad waste is bounded to < 128 rows per tile
    (instead of up to a full tile); and the grid has >= 2 steps whenever
    B >= 256 so v7x's two TensorCores both get tiles.
    """
    tb_max = max(128, _round_up(tb_max, 128))
    b128 = _round_up(max(batch, 1), 128)
    groups = b128 // 128
    n_tiles = _cdiv(b128, tb_max)
    if n_tiles == 1 and b128 >= 256:
        n_tiles = 2                      # keep both v7x TensorCores busy
    tile = 128 * _cdiv(groups, n_tiles)
    return tile, tile * n_tiles, n_tiles


def servonet_kernel(x_ref, w_ref, b_ref, o_ref, *, ep_dtype):
    # x_ref: (tb, 6) f32 in the natural (batch, feature) layout.
    x = x_ref[...].astype(jnp.bfloat16)                                   # (tb, 6)

    # fc1: h1 = W1 @ x^T via an NT matmul -> batch lands on lanes for free
    # (the MXU does the relayout; no wrapper or XLU transpose of x needed).
    w1 = w_ref[0:32, 0:6]                                                 # (32, 6)
    h1 = lax.dot_general(w1, x, _NT_DIMS,
                         preferred_element_type=jnp.float32)              # (32, tb) f32
    b1 = b_ref[0:32, :].astype(ep_dtype)
    a1 = jnp.maximum(h1.astype(ep_dtype) + b1, 0.0).astype(jnp.bfloat16)  # (32, tb)

    # fc2 (+ ReLU), lane-dense epilogue in ep_dtype.
    w2 = w_ref[32:48, 0:32]                                               # (16, 32)
    h2 = jnp.dot(w2, a1, preferred_element_type=jnp.float32)              # (16, tb) f32
    b2 = b_ref[32:48, :].astype(ep_dtype)
    a2 = jnp.maximum(h2.astype(ep_dtype) + b2, 0.0).astype(jnp.bfloat16)  # (16, tb)

    # fc3 (no activation).  Rows 2:8 of W3/b3 are zero padding and are dropped
    # after the transpose below; f32 bias-add keeps the output at full precision.
    w3 = w_ref[48:56, 0:16]                                               # (8, 16)
    h3 = jnp.dot(w3, a2, preferred_element_type=jnp.float32)              # (8, tb) f32
    h3 = h3 + b_ref[48:56, :]                                             # (8, 1) f32 bias

    # Back to the natural (batch, feature) layout and store (tb, 2) directly,
    # so the wrapper needs no output transpose pass.
    o_ref[...] = jnp.transpose(h3)[:, 0:2].astype(o_ref.dtype)


def servonet_forward(x, w_slab, b_slab, *, tb=8192, ep_dtype=None):
    """x: (B, 6) float32 -> (B, 2) float32, matching
    relu(relu(x @ W1^T + b1) @ W2^T + b2) @ W3^T + b3 (bf16 MXU, f32 accumulate)."""
    if ep_dtype is None:
        ep_dtype = _default_epilogue_dtype()

    batch = x.shape[0]
    tile, b_pad, n_tiles = _choose_tiling(batch, tb)

    # Only ragged batches need a zero-pad pass; tile-aligned batches go straight in.
    if b_pad != batch:
        x_in = jnp.zeros((b_pad, 6), x.dtype).at[:batch, :].set(x)
    else:
        x_in = x

    out = pl.pallas_call(
        functools.partial(servonet_kernel, ep_dtype=ep_dtype),
        out_shape=jax.ShapeDtypeStruct((b_pad, 2), jnp.float32),
        grid=(n_tiles,),
        in_specs=[
            pl.BlockSpec((tile, 6), lambda i: (i, 0)),            # activations, tiled on batch
            pl.BlockSpec((W_ROWS, W_COLS), lambda i: (0, 0)),     # packed weights, resident
            pl.BlockSpec((B_ROWS, 1), lambda i: (0, 0)),          # packed biases,  resident
        ],
        out_specs=pl.BlockSpec((tile, 2), lambda i: (i, 0)),
        compiler_params=pltpu.CompilerParams(
            dimension_semantics=("parallel",),     # batch tiles shard across v7x's 2 TCs
            vmem_limit_bytes=48 * 1024 * 1024,     # narrow (tb, k) blocks pad to 128 lanes
        ),
    )(x_in, w_slab, b_slab)

    if b_pad != batch:
        out = out[:batch]
    return out


def init_params(key):
    """PyTorch-style uniform(-1/sqrt(fan_in), 1/sqrt(fan_in)) init.

    Weights kept in PyTorch nn.Linear layout (out_features, in_features); biases (out,).
    """
    dims = [(6, 32), (32, 16), (16, 2)]
    params = {}
    keys = jax.random.split(key, 2 * len(dims))
    for i, (fan_in, fan_out) in enumerate(dims):
        bound = 1.0 / (fan_in ** 0.5)
        params[f"w{i + 1}"] = jax.random.uniform(
            keys[2 * i], (fan_out, fan_in), jnp.float32, -bound, bound)
        params[f"b{i + 1}"] = jax.random.uniform(
            keys[2 * i + 1], (fan_out,), jnp.float32, -bound, bound)
    return params


def pack_params(params):
    """Pack W1/W2/W3 into one bf16 slab and b1/b2/b3 into one f32 column slab."""
    w = jnp.zeros((W_ROWS, W_COLS), jnp.float32)
    w = w.at[0:32, 0:6].set(params["w1"])
    w = w.at[32:48, 0:32].set(params["w2"])
    w = w.at[48:50, 0:16].set(params["w3"])
    b = jnp.zeros((B_ROWS, 1), jnp.float32)
    b = b.at[0:32, 0].set(params["b1"])
    b = b.at[32:48, 0].set(params["b2"])
    b = b.at[48:50, 0].set(params["b3"])
    return w.astype(jnp.bfloat16), b


def servonet_ref(x, params, ep_dtype):
    """Pure-JAX reference mirroring the kernel's precision recipe."""
    w1 = params["w1"].astype(jnp.bfloat16)
    w2 = params["w2"].astype(jnp.bfloat16)
    w3 = params["w3"].astype(jnp.bfloat16)
    h = jnp.dot(x.astype(jnp.bfloat16), w1.T, preferred_element_type=jnp.float32)
    h = jnp.maximum(h.astype(ep_dtype) + params["b1"].astype(ep_dtype), 0.0)
    h = h.astype(jnp.bfloat16)
    h = jnp.dot(h, w2.T, preferred_element_type=jnp.float32)
    h = jnp.maximum(h.astype(ep_dtype) + params["b2"].astype(ep_dtype), 0.0)
    h = h.astype(jnp.bfloat16)
    return jnp.dot(h, w3.T, preferred_element_type=jnp.float32) + params["b3"]


if __name__ == "__main__":
    key = jax.random.PRNGKey(0)
    k_params, k_x = jax.random.split(key)

    params = init_params(k_params)
    w_slab, b_slab = pack_params(params)
    ep = _default_epilogue_dtype()

    # Small batch: single 128-wide tile, single grid step.
    B = 8
    x = jax.random.normal(k_x, (B, 6), jnp.float32)
    out = jax.block_until_ready(servonet_forward(x, w_slab, b_slab, ep_dtype=ep))
    ref = servonet_ref(x, params, ep)
    assert out.shape == (B, 2), out.shape
    assert jnp.allclose(out, ref, atol=2e-2, rtol=2e-2), "mismatch vs reference (B=8)"

    # Ragged batch: exercises zero-padding, bounded pad waste and a 2-step grid.
    B2 = 300
    x2 = jax.random.normal(jax.random.PRNGKey(1), (B2, 6), jnp.float32)
    out2 = jax.block_until_ready(servonet_forward(x2, w_slab, b_slab, ep_dtype=ep))
    ref2 = servonet_ref(x2, params, ep)
    assert out2.shape == (B2, 2), out2.shape
    assert jnp.allclose(out2, ref2, atol=2e-2, rtol=2e-2), "mismatch vs reference (B=300)"

    print("KERNEL_OK")
</pallas_src>

<mosaic_0001>
module attributes {stable_mosaic.version = 11 : i64} {
  func.func @servonet_kernel(%arg0: i32, %arg1: memref<128x6xf32, #tpu.memory_space<vmem>>, %arg2: memref<56x32xbf16, #tpu.memory_space<vmem>>, %arg3: memref<56x1xf32, #tpu.memory_space<vmem>>, %arg4: memref<128x2xf32, #tpu.memory_space<vmem>>) attributes {dimension_semantics = [#tpu.dimension_semantics<parallel>], iteration_bounds = array<i64: 1>, scalar_prefetch = 0 : i64, scratch_operands = 0 : i64, tpu.core_type = #tpu.core_type<tc>, window_params = [{transform_indices = @transform_0, window_bounds = array<i64: 128, 6>}, {pipeline_mode = #tpu.pipeline_mode<synchronous>, transform_indices = @transform_1, window_bounds = array<i64: 56, 32>}, {pipeline_mode = #tpu.pipeline_mode<synchronous>, transform_indices = @transform_2, window_bounds = array<i64: 56, 1>}, {transform_indices = @transform_3, window_bounds = array<i64: 128, 2>}]} {
    %c0 = arith.constant 0 : index
    %c0_0 = arith.constant 0 : index
    %0 = vector.load %arg1[%c0, %c0_0] : memref<128x6xf32, #tpu.memory_space<vmem>>, vector<128x6xf32>
    %1 = arith.truncf %0 : vector<128x6xf32> to vector<128x6xbf16>
    %c0_1 = arith.constant 0 : index
    %c0_2 = arith.constant 0 : index
    %2 = vector.load %arg2[%c0_1, %c0_2] : memref<56x32xbf16, #tpu.memory_space<vmem>>, vector<32x6xbf16>
    %cst = arith.constant dense<0.000000e+00> : vector<32x128xf32>
    %3 = tpu.matmul %2, %1, %cst {dimension_numbers = #tpu.dot_dimension_numbers<[1], [1], [0], [0], [0, 0, 1, 0], [], []>} : vector<32x6xbf16>, vector<128x6xbf16>, vector<32x128xf32> -> vector<32x128xf32>
    %c0_3 = arith.constant 0 : index
    %c0_4 = arith.constant 0 : index
    %4 = vector.load %arg3[%c0_3, %c0_4] : memref<56x1xf32, #tpu.memory_space<vmem>>, vector<32x1xf32>
    %5 = arith.truncf %4 : vector<32x1xf32> to vector<32x1xbf16>
    %6 = arith.truncf %3 : vector<32x128xf32> to vector<32x128xbf16>
    %7 = vector.broadcast %5 : vector<32x1xbf16> to vector<32x128xbf16>
    %8 = arith.addf %6, %7 : vector<32x128xbf16>
    %cst_5 = arith.constant 0.000000e+00 : bf16
    %9 = vector.broadcast %cst_5 : bf16 to vector<32x128xbf16>
    %10 = arith.maximumf %8, %9 : vector<32x128xbf16>
    %c32 = arith.constant 32 : index
    %c0_6 = arith.constant 0 : index
    %11 = vector.load %arg2[%c32, %c0_6] : memref<56x32xbf16, #tpu.memory_space<vmem>>, vector<16x32xbf16>
    %cst_7 = arith.constant dense<0.000000e+00> : vector<16x128xf32>
    %12 = tpu.matmul %11, %10, %cst_7 {dimension_numbers = #tpu.dot_dimension_numbers<[1], [0], [0], [1], [0, 0, 1, 1], [], []>} : vector<16x32xbf16>, vector<32x128xbf16>, vector<16x128xf32> -> vector<16x128xf32>
    %c32_8 = arith.constant 32 : index
    %c0_9 = arith.constant 0 : index
    %13 = vector.load %arg3[%c32_8, %c0_9] : memref<56x1xf32, #tpu.memory_space<vmem>>, vector<16x1xf32>
    %14 = arith.truncf %13 : vector<16x1xf32> to vector<16x1xbf16>
    %15 = arith.truncf %12 : vector<16x128xf32> to vector<16x128xbf16>
    %16 = vector.broadcast %14 : vector<16x1xbf16> to vector<16x128xbf16>
    %17 = arith.addf %15, %16 : vector<16x128xbf16>
    %cst_10 = arith.constant 0.000000e+00 : bf16
    %18 = vector.broadcast %cst_10 : bf16 to vector<16x128xbf16>
    %19 = arith.maximumf %17, %18 : vector<16x128xbf16>
    %c48 = arith.constant 48 : index
    %c0_11 = arith.constant 0 : index
    %20 = vector.load %arg2[%c48, %c0_11] : memref<56x32xbf16, #tpu.memory_space<vmem>>, vector<8x16xbf16>
    %cst_12 = arith.constant dense<0.000000e+00> : vector<8x128xf32>
    %21 = tpu.matmul %20, %19, %cst_12 {dimension_numbers = #tpu.dot_dimension_numbers<[1], [0], [0], [1], [0, 0, 1, 1], [], []>} : vector<8x16xbf16>, vector<16x128xbf16>, vector<8x128xf32> -> vector<8x128xf32>
    %c48_13 = arith.constant 48 : index
    %c0_14 = arith.constant 0 : index
    %22 = vector.load %arg3[%c48_13, %c0_14] : memref<56x1xf32, #tpu.memory_space<vmem>>, vector<8x1xf32>
    %23 = vector.broadcast %22 : vector<8x1xf32> to vector<8x128xf32>
    %24 = arith.addf %21, %23 : vector<8x128xf32>
    %25 = tpu.transpose %24, [1, 0] : vector<8x128xf32> -> vector<128x8xf32>
    %26 = vector.extract_strided_slice %25 {offsets = [0, 0], sizes = [128, 2], strides = [1, 1]} : vector<128x8xf32> to vector<128x2xf32>
    %c0_15 = arith.constant 0 : index
    %c0_16 = arith.constant 0 : index
    %27 = vector.load %arg4[%c0_15, %c0_16] : memref<128x2xf32, #tpu.memory_space<vmem>>, vector<128x2xf32>
    tpu.vector_store %arg4[%c0_15, %c0_16], %26 {strides = array<i32>} : memref<128x2xf32, #tpu.memory_space<vmem>>, vector<128x2xf32>,
    return
  }
  func.func @transform_0(%arg0: i32) -> (i32, i32) {
    %c0_i32 = arith.constant 0 : i32
    %c0_i32_0 = arith.constant 0 : i32
    return %arg0, %c0_i32 : i32, i32
  }
  func.func @transform_1(%arg0: i32) -> (i32, i32) {
    %c0_i32 = arith.constant 0 : i32
    %c0_i32_0 = arith.constant 0 : i32
    %c0_i32_1 = arith.constant 0 : i32
    return %c0_i32, %c0_i32_0 : i32, i32
  }
  func.func @transform_2(%arg0: i32) -> (i32, i32) {
    %c0_i32 = arith.constant 0 : i32
    %c0_i32_0 = arith.constant 0 : i32
    %c0_i32_1 = arith.constant 0 : i32
    return %c0_i32, %c0_i32_0 : i32, i32
  }
  func.func @transform_3(%arg0: i32) -> (i32, i32) {
    %c0_i32 = arith.constant 0 : i32
    %c0_i32_0 = arith.constant 0 : i32
    return %arg0, %c0_i32 : i32, i32
  }
}

</mosaic_0001>

<llo_original>
// kernel: tpu_custom_call.1
$region0: #{tpu_custom_call.1}
  #allocation0 [shape = 'u32[]', space=smem, size = 0x4, offset = 0x4, fixed_abs, tag = 'smem constant byte address 0x4 - core index']
  #allocation1 [shape = 'u32[144,128]{1,0:T(1,128)}', space=vmem, size = 0x12000, scoped, tag = 'internal scratch']
  %s0 = inlined_call_operand.vmem [shape: f32[128,6], index: 0, kind: input, shape index: {}]
  %s1 = inlined_call_operand.vmem [shape: bf16[56,32], index: 1, kind: input, shape index: {}]
  %s2 = inlined_call_operand.vmem [shape: f32[56,1], index: 2, kind: input, shape index: {}]
  %s3 = inlined_call_operand.vmem [shape: f32[128,2], index: 3, kind: output, shape index: {}]
  %s4 = sld [smem:[#allocation0]]
  $region22: #{tpu_custom_call.1} parent=0
    _
  %s6 = ssub.s32 1, %s4
  %s7 = scalar_select 0, %s6, %s4
  // Predicated region
  $region2: #{tpu_custom_call.1} parent=0 // pred_check
    _
  $region3: #{tpu_custom_call.1} parent=0 // pred_check_branch
    %9 = sbr.rel (0) target = $region5
  $region4: #{tpu_custom_call.1} parent=0 // pred_region
    _
  $region5: #{tpu_custom_call.1} parent=0 // pred_fallthru
    _
  // Predicated region
  $region6: #{tpu_custom_call.1} parent=0 // pred_check
    _
  $region7: #{tpu_custom_call.1} parent=0 // pred_check_branch
    %11 = sbr.rel (0) target = $region9
  $region8: #{tpu_custom_call.1} parent=0 // pred_region
    _
  $region9: #{tpu_custom_call.1} parent=0 // pred_fallthru
    _
  // Predicated region
  $region10: #{tpu_custom_call.1} parent=0 // pred_check
    _
  $region11: #{tpu_custom_call.1} parent=0 // pred_check_branch
    %13 = sbr.rel (0) target = $region13
  $region12: #{tpu_custom_call.1} parent=0 // pred_region
    _
  $region13: #{tpu_custom_call.1} parent=0 // pred_fallthru
    _
  %v15 = vld [vmem:[%s0] sm:$0xff]
  %v16 = vld [vmem:[%s0 + $0x8] sm:$0xff]
  %v17 = vld [vmem:[%s0 + $0x10] sm:$0xff]
  %v18 = vld [vmem:[%s0 + $0x18] sm:$0xff]
  %v19 = vld [vmem:[%s0 + $0x20] sm:$0xff]
  %v20 = vld [vmem:[%s0 + $0x28] sm:$0xff]
  %v21 = vld [vmem:[%s0 + $0x30] sm:$0xff]
  %v22 = vld [vmem:[%s0 + $0x38] sm:$0xff]
  %v23 = vld [vmem:[%s0 + $0x40] sm:$0xff]
  %v24 = vld [vmem:[%s0 + $0x48] sm:$0xff]
  %v25 = vld [vmem:[%s0 + $0x50] sm:$0xff]
  %v26 = vld [vmem:[%s0 + $0x58] sm:$0xff]
  %v27 = vld [vmem:[%s0 + $0x60] sm:$0xff]
  %v28 = vld [vmem:[%s0 + $0x68] sm:$0xff]
  %v29 = vld [vmem:[%s0 + $0x70] sm:$0xff]
  %v30 = vld [vmem:[%s0 + $0x78] sm:$0xff]
  %v31 = vpack.c.bf16 %v16, %v15
  %v32 = vpack.c.bf16 %v18, %v17
  %v33 = vpack.c.bf16 %v20, %v19
  %v34 = vpack.c.bf16 %v22, %v21
  %v35 = vpack.c.bf16 %v24, %v23
  %v36 = vpack.c.bf16 %v26, %v25
  %v37 = vpack.c.bf16 %v28, %v27
  %v38 = vpack.c.bf16 %v30, %v29
  %v39 = vld [vmem:[%s1] sm:$0xf]
  %v40 = vld [vmem:[%s1 + $0x4] sm:$0xf]
  %v41 = vld [vmem:[%s1 + $0x8] sm:$0xf]
  %v42 = vld [vmem:[%s1 + $0xc] sm:$0xf]
  %v47 = vunpack.c.l.b16 %v39
  %v48 = vunpack.c.l.b16 %v40
  %v49 = vunpack.c.l.b16 %v41
  %v50 = vunpack.c.l.b16 %v42
  %v51 = vpack.c.b16 %v48, %v47
  %v52 = vpack.c.b16 %v50, %v49
  %vm53 = vcmask 48128
  %v55 = vsel %vm53, %v51, 0
  %v58 = vsel %vm53, %v52, 0
  %v61 = vsel %vm53, %v31, 0
  %v64 = vsel %vm53, %v32, 0
  %v67 = vsel %vm53, %v33, 0
  %v70 = vsel %vm53, %v34, 0
  %v73 = vsel %vm53, %v35, 0
  %v76 = vsel %vm53, %v36, 0
  %v79 = vsel %vm53, %v37, 0
  %v82 = vsel %vm53, %v38, 0
  %84 = vmatprep.subr.bf16.mxu0 0
  %85 = vmatpush1.bf16.xpose.msra.mxu0 %v82
  %86 = vmatprep.subr.bf16.mxu0 0
  %87 = vmatpush1.bf16.xpose.msra.mxu0 %v79
  %88 = vmatprep.subr.bf16.mxu0 0
  %89 = vmatpush1.bf16.xpose.msra.mxu0 %v76
  %90 = vmatprep.subr.bf16.mxu0 0
  %91 = vmatpush1.bf16.xpose.msra.mxu0 %v73
  %92 = vmatprep.subr.bf16.mxu0 0
  %93 = vmatpush1.bf16.xpose.msra.mxu0 %v70
  %94 = vmatprep.subr.bf16.mxu0 0
  %95 = vmatpush1.bf16.xpose.msra.mxu0 %v67
  %96 = vmatprep.subr.bf16.mxu0 0
  %97 = vmatpush1.bf16.xpose.msra.mxu0 %v64
  %98 = vmatprep.subr.bf16.mxu0 0
  %99 = vmatpush1.bf16.xpose.msra.mxu0 %v61
  %100 = vmatprep.subr.bf16.mxu0 0
  %101 = vmatpush2.bf16.xpose.msra.mxu0 0
  %102 = vmatprep.subr.bf16.mxu0 0
  %103 = vmatpush2.bf16.xpose.msra.mxu0 0
  %104 = vmatprep.subr.bf16.mxu0 0
  %105 = vmatpush2.bf16.xpose.msra.mxu0 0
  %106 = vmatprep.subr.bf16.mxu0 0
  %107 = vmatpush2.bf16.xpose.msra.mxu0 0
  %108 = vmatprep.subr.bf16.mxu0 0
  %109 = vmatpush2.bf16.xpose.msra.mxu0 0
  %110 = vmatprep.subr.bf16.mxu0 0
  %111 = vmatpush2.bf16.xpose.msra.mxu0 0
  %112 = vmatprep.subr.bf16.mxu0 0
  %113 = vmatpush2.bf16.xpose.msra.mxu0 0
  %114 = vmatprep.subr.bf16.mxu0 0
  %115 = vmatpush2.bf16.xpose.msra.mxu0 0
  %116 = vmatprep.mubr.bf16.mxu0 0
  %117 = vmatmul.mubr.bf16.gmra.mxu0 %v55
  %v118 = vpop.f32.mrf.mxu0
  %v119 = vadd.f32 0.0, %v118
  %v120 = vpop.f32.mrf.mxu0
  %v121 = vpop.f32.mrf.mxu0
  %v122 = vadd.f32 0.0, %v121
  %v123 = vpop.f32.mrf.mxu0
  %124 = vmatprep.mubr.bf16.mxu0 0
  %125 = vmatmul.mubr.bf16.gmra.mxu0 %v58
  %v126 = vpop.f32.mrf.mxu0
  %v127 = vadd.f32 0.0, %v126
  %v128 = vpop.f32.mrf.mxu0
  %v129 = vpop.f32.mrf.mxu0
  %v130 = vadd.f32 0.0, %v129
  %v131 = vpop.f32.mrf.mxu0
  %132 = vdwg.mxu0
  %v133 = vld [vmem:[%s2] sm:$0xff]
  %v134 = vld [vmem:[%s2 + $0x8] sm:$0xff]
  %v135 = vld [vmem:[%s2 + $0x10] sm:$0xff]
  %v136 = vld [vmem:[%s2 + $0x18] sm:$0xff]
  %v137 = vpack.c.bf16 %v134, %v133
  %v138 = vpack.c.bf16 %v136, %v135
  %v139 = vpack.c.bf16 %v122, %v119
  %v140 = vpack.c.bf16 %v130, %v127
  %142 = vset.pattern.permute.xlu0 0
  %143 = vperm.xlu0 %142, %v137
  %v144 = vpop.permute.xlu0 %143
  %147 = vset.pattern.permute.xlu0 0
  %148 = vperm.xlu0 %147, %v138
  %v149 = vpop.permute.xlu0 %148
  %v151 = vadd.bf16 %v139, %v144
  %v152 = vadd.bf16 %v140, %v149
  %v153 = vmax.bf16 %v151, 0
  %v154 = vmax.bf16 %v152, 0
  %v155 = vld [vmem:[%s1 + $0x10] sm:$0xf]
  %v156 = vld [vmem:[%s1 + $0x14] sm:$0xf]
  %v159 = vunpack.c.l.b16 %v155
  %v160 = vunpack.c.l.b16 %v156
  %v161 = vpack.c.b16 %v160, %v159
  %vm162 = vcmask 261120
  %v164 = vsel %vm162, %v161, 0
  %166 = vmatprep.subr.bf16.mxu0 0
  %167 = vmatpush1.bf16.msra.mxu0 0
  %168 = vmatprep.subr.bf16.mxu0 0
  %169 = vmatpush1.bf16.msra.mxu0 0
  %170 = vmatprep.subr.bf16.mxu0 0
  %171 = vmatpush1.bf16.msra.mxu0 0
  %172 = vmatprep.subr.bf16.mxu0 0
  %173 = vmatpush1.bf16.msra.mxu0 0
  %174 = vmatprep.subr.bf16.mxu0 0
  %175 = vmatpush1.bf16.msra.mxu0 0
  %176 = vmatprep.subr.bf16.mxu0 0
  %177 = vmatpush1.bf16.msra.mxu0 0
  %178 = vmatprep.subr.bf16.mxu0 0
  %179 = vmatpush1.bf16.msra.mxu0 %v154
  %180 = vmatprep.subr.bf16.mxu0 0
  %181 = vmatpush1.bf16.msra.mxu0 %v153
  %182 = vmatprep.subr.bf16.mxu0 0
  %183 = vmatpush2.bf16.msra.mxu0 0
  %184 = vmatprep.subr.bf16.mxu0 0
  %185 = vmatpush2.bf16.msra.mxu0 0
  %186 = vmatprep.subr.bf16.mxu0 0
  %187 = vmatpush2.bf16.msra.mxu0 0
  %188 = vmatprep.subr.bf16.mxu0 0
  %189 = vmatpush2.bf16.msra.mxu0 0
  %190 = vmatprep.subr.bf16.mxu0 0
  %191 = vmatpush2.bf16.msra.mxu0 0
  %192 = vmatprep.subr.bf16.mxu0 0
  %193 = vmatpush2.bf16.msra.mxu0 0
  %194 = vmatprep.subr.bf16.mxu0 0
  %195 = vmatpush2.bf16.msra.mxu0 0
  %196 = vmatprep.subr.bf16.mxu0 0
  %197 = vmatpush2.bf16.msra.mxu0 0
  %198 = vmatprep.mubr.bf16.mxu0 0
  %199 = vmatmul.mubr.bf16.gmra.mxu0 %v164
  %v200 = vpop.f32.mrf.mxu0
  %v201 = vadd.f32 0.0, %v200
  %v202 = vpop.f32.mrf.mxu0
  %v203 = vpop.f32.mrf.mxu0
  %v204 = vadd.f32 0.0, %v203
  %v205 = vpop.f32.mrf.mxu0
  %206 = vdwg.mxu0
  %v207 = vld [vmem:[%s2 + $0x20] sm:$0xff]
  %v208 = vld [vmem:[%s2 + $0x28] sm:$0xff]
  %v209 = vpack.c.bf16 %v208, %v207
  %v210 = vpack.c.bf16 %v204, %v201
  %212 = vset.pattern.permute.xlu0 0
  %213 = vperm.xlu0 %212, %v209
  %v214 = vpop.permute.xlu0 %213
  %v216 = vadd.bf16 %v210, %v214
  %v217 = vmax.bf16 %v216, 0
  %v218 = vld [vmem:[%s1 + $0x18] sm:$0xf]
  %v219 = vld [vmem:[%s2 + $0x30] sm:$0xff]
  %221 = vset.pattern.permute.xlu0 0
  %222 = vperm.xlu0 %221, %v219
  %v223 = vpop.permute.xlu0 %222
  %vm225 = vcmask 130048
  %v227 = vsel %vm225, %v218, 0
  %229 = vmatprep.subr.bf16.mxu0 0
  %230 = vmatpush1.bf16.msra.mxu0 0
  %231 = vmatprep.subr.bf16.mxu0 0
  %232 = vmatpush1.bf16.msra.mxu0 0
  %233 = vmatprep.subr.bf16.mxu0 0
  %234 = vmatpush1.bf16.msra.mxu0 0
  %235 = vmatprep.subr.bf16.mxu0 0
  %236 = vmatpush1.bf16.msra.mxu0 0
  %237 = vmatprep.subr.bf16.mxu0 0
  %238 = vmatpush1.bf16.msra.mxu0 0
  %239 = vmatprep.subr.bf16.mxu0 0
  %240 = vmatpush1.bf16.msra.mxu0 0
  %241 = vmatprep.subr.bf16.mxu0 0
  %242 = vmatpush1.bf16.msra.mxu0 0
  %243 = vmatprep.subr.bf16.mxu0 0
  %244 = vmatpush1.bf16.msra.mxu0 %v217
  %245 = vmatprep.subr.bf16.mxu0 0
  %246 = vmatpush2.bf16.msra.mxu0 0
  %247 = vmatprep.subr.bf16.mxu0 0
  %248 = vmatpush2.bf16.msra.mxu0 0
  %249 = vmatprep.subr.bf16.mxu0 0
  %250 = vmatpush2.bf16.msra.mxu0 0
  %251 = vmatprep.subr.bf16.mxu0 0
  %252 = vmatpush2.bf16.msra.mxu0 0
  %253 = vmatprep.subr.bf16.mxu0 0
  %254 = vmatpush2.bf16.msra.mxu0 0
  %255 = vmatprep.subr.bf16.mxu0 0
  %256 = vmatpush2.bf16.msra.mxu0 0
  %257 = vmatprep.subr.bf16.mxu0 0
  %258 = vmatpush2.bf16.msra.mxu0 0
  %259 = vmatprep.subr.bf16.mxu0 0
  %260 = vmatpush2.bf16.msra.mxu0 0
  %261 = vmatprep.mubr.bf16.mxu0 0
  %262 = vmatmul.mubr.bf16.gmra.mxu0 %v227
  %v263 = vpop.f32.mrf.mxu0
  %v264 = vadd.f32 %v223, %v263
  %v265 = vpop.f32.mrf.mxu0
  %v266 = vpop.f32.mrf.mxu0
  %v267 = vpop.f32.mrf.mxu0
  %268 = vdwg.mxu0
  %269 = vxpose.xlu0.b32.start [1/16] %v264, 128
  %270 = vxpose.xlu0.b32.cont [2/16] 0.0, 128
  %271 = vxpose.xlu0.b32.cont [3/16] 0.0, 128
  %272 = vxpose.xlu0.b32.cont [4/16] 0.0, 128
  %273 = vxpose.xlu0.b32.cont [5/16] 0.0, 128
  %274 = vxpose.xlu0.b32.cont [6/16] 0.0, 128
  %275 = vxpose.xlu0.b32.cont [7/16] 0.0, 128
  %276 = vxpose.xlu0.b32.cont [8/16] 0.0, 128
  %277 = vxpose.xlu0.b32.cont [9/16] 0.0, 128
  %278 = vxpose.xlu0.b32.cont [10/16] 0.0, 128
  %279 = vxpose.xlu0.b32.cont [11/16] 0.0, 128
  %280 = vxpose.xlu0.b32.cont [12/16] 0.0, 128
  %281 = vxpose.xlu0.b32.cont [13/16] 0.0, 128
  %282 = vxpose.xlu0.b32.cont [14/16] 0.0, 128
  %283 = vxpose.xlu0.b32.cont [15/16] 0.0, 128
  %284 = vxpose.xlu0.b32.end [16/16] 0.0, 128
  %v285 = vpop.trf.xlu0
  %v286 = vpop.trf.xlu0
  %v287 = vpop.trf.xlu0
  %v288 = vpop.trf.xlu0
  %v289 = vpop.trf.xlu0
  %v290 = vpop.trf.xlu0
  %v291 = vpop.trf.xlu0
  %v292 = vpop.trf.xlu0
  %v293 = vpop.trf.xlu0
  %v294 = vpop.trf.xlu0
  %v295 = vpop.trf.xlu0
  %v296 = vpop.trf.xlu0
  %v297 = vpop.trf.xlu0
  %v298 = vpop.trf.xlu0
  %v299 = vpop.trf.xlu0
  %v300 = vpop.trf.xlu0
  %vm301 = vcmask 15360
  %302 = vst.msk [vmem:[%s3] sm:$0xff] %vm301, %v285
  %303 = vst.msk [vmem:[%s3 + $0x8] sm:$0xff] %vm301, %v286
  %304 = vst.msk [vmem:[%s3 + $0x10] sm:$0xff] %vm301, %v287
  %305 = vst.msk [vmem:[%s3 + $0x18] sm:$0xff] %vm301, %v288
  %306 = vst.msk [vmem:[%s3 + $0x20] sm:$0xff] %vm301, %v289
  %307 = vst.msk [vmem:[%s3 + $0x28] sm:$0xff] %vm301, %v290
  %308 = vst.msk [vmem:[%s3 + $0x30] sm:$0xff] %vm301, %v291
  %309 = vst.msk [vmem:[%s3 + $0x38] sm:$0xff] %vm301, %v292
  %310 = vst.msk [vmem:[%s3 + $0x40] sm:$0xff] %vm301, %v293
  %311 = vst.msk [vmem:[%s3 + $0x48] sm:$0xff] %vm301, %v294
  %312 = vst.msk [vmem:[%s3 + $0x50] sm:$0xff] %vm301, %v295
  %313 = vst.msk [vmem:[%s3 + $0x58] sm:$0xff] %vm301, %v296
  %314 = vst.msk [vmem:[%s3 + $0x60] sm:$0xff] %vm301, %v297
  %315 = vst.msk [vmem:[%s3 + $0x68] sm:$0xff] %vm301, %v298
  %316 = vst.msk [vmem:[%s3 + $0x70] sm:$0xff] %vm301, %v299
  %317 = vst.msk [vmem:[%s3 + $0x78] sm:$0xff] %vm301, %v300
  // Predicated region
  $region14: #{tpu_custom_call.1} parent=0 // pred_check
    _
  $region15: #{tpu_custom_call.1} parent=0 // pred_check_branch
    %319 = sbr.rel (0) target = $region17
  $region16: #{tpu_custom_call.1} parent=0 // pred_region
    _
  $region17: #{tpu_custom_call.1} parent=0 // pred_fallthru
    _
  // Predicated region
  $region18: #{tpu_custom_call.1} parent=0 // pred_check
    _
  $region19: #{tpu_custom_call.1} parent=0 // pred_check_branch
    %321 = sbr.rel (0) target = $region21
  $region20: #{tpu_custom_call.1} parent=0 // pred_region
    _
  $region21: #{tpu_custom_call.1} parent=0 // pred_fallthru
    _

</llo_original>
